<compile_context>
chip_gen: v7x
topology: tpu7x:2x2x1
jax: 0.10.0
libtpu: 0.0.40
codegen_flags: <defaults>
</compile_context>

<pallas_src>
import functools

import jax
import jax.numpy as jnp
import numpy as np
from jax import lax
from jax.experimental import pallas as pl
from jax.experimental.pallas import tpu as pltpu

# tap order matches PyTorch depthwise weight layout: t = kh*3 + kw, (dh, dw) = (kh-1, kw-1)
_TAPS = tuple((dh, dw) for dh in (-1, 0, 1) for dw in (-1, 0, 1))


def _build_fused_matrix(H, W, output_size, stride_size, kernel_size, ct_size):
    """(9*S, H*W) f32 matrix fusing, for every 3x3 tap t:
         the tap's spatial shift, the padding=1 zero mask, the AvgPool2d(kernel, stride)
         and the carrier-token view->permute(0,2,4,3,5,1)->reshape reordering.
       Handles overlapping pools (kernel != stride)."""
    Hout = Wout = output_size
    ws = ct_size
    nWw = Wout // ws
    S = Hout * Wout
    inv = 1.0 / float(kernel_size * kernel_size)

    # AvgPool + window permutation: pt[s, h, w]
    pt = np.zeros((S, H, W), np.float32)
    for ho in range(Hout):
        for wo in range(Wout):
            wi, si = divmod(ho, ws)
            wj, sj = divmod(wo, ws)
            s = ((wi * nWw + wj) * ws + si) * ws + sj
            pt[s,
               ho * stride_size:ho * stride_size + kernel_size,
               wo * stride_size:wo * stride_size + kernel_size] += inv

    # Fold in the 9 depthwise taps (shift + zero-padding mask):
    #   ptm[t, s, h*W+w] = pt[s, h-dh, w-dw]  if (h-dh, w-dw) in bounds else 0
    ptm = np.zeros((9, S, H, W), np.float32)
    for t, (dh, dw) in enumerate(_TAPS):
        h0, h1 = max(0, dh), min(H, H + dh)
        w0, w1 = max(0, dw), min(W, W + dw)
        ptm[t, :, h0:h1, w0:w1] = pt[:, h0 - dh:h1 - dh, w0 - dw:w1 - dw]
    return ptm.reshape(9 * S, H * W)


def _token_init_kernel(x_ref, ptm_ref, w_ref, b_ref, o_ref, *, S, C):
    """One batch block per grid step.

    x_ref  : (Bt*C, P)   rows = (image, channel), lanes = flattened spatial (P = H*W)
    ptm_ref: (9*S, P)    fused shift+mask+pool+permute matrix (resident constant)
    w_ref  : (9, Bt*C)   per-channel 3x3 taps, pre-tiled over the block's images (f32)
    b_ref  : (1, Bt*C)   conv bias, pre-tiled (f32)
    o_ref  : (Bt, S, C)  carrier tokens in the module's final layout
    """
    Bt = o_ref.shape[0]

    # Single MXU matmul: applies all 9 conv shifts, the padding=1 edge masks,
    # the AvgPool and the window permutation for every (image, channel) row.
    r = lax.dot_general(
        ptm_ref[...], x_ref[...],
        dimension_numbers=(((1,), (1,)), ((), ())),
        preferred_element_type=jnp.float32)                 # (9*S, Bt*C) f32

    # Tiny VPU epilogue: per-channel tap weights + bias.
    # (bias-after-pool is exact because every pooling row of PTM's tap sums to 1)
    w_bc = w_ref[...]                                       # (9, Bt*C)
    acc = w_bc[0:1, :] * r[0:S, :]
    for t in range(1, 9):
        acc = acc + w_bc[t:t + 1, :] * r[t * S:(t + 1) * S, :]
    acc = acc + b_ref[...]                                  # (S, Bt*C)

    # Dense (S, C) store per image; lane-dense & unmasked whenever C % 128 == 0.
    for bb in range(Bt):
        o_ref[bb] = acc[:, bb * C:(bb + 1) * C].astype(o_ref.dtype)


def token_initializer_forward(x_nchw, w, b, *, input_resolution, window_size,
                              ct_size=1, block_bytes_cap=8 << 20,
                              max_images_per_block=32):
    """Pallas TPU implementation of TokenInitializer.forward.

    x_nchw: (B, C, H, W)  activations (f32 or bf16)
    w     : (C, 1, 3, 3)  depthwise conv weight (groups=C)
    b     : (C,)          conv bias
    returns ct: (B, Hout*Wout, C), identical ordering to the PyTorch module.
    """
    B, C, H, W_sp = x_nchw.shape
    assert H == input_resolution and W_sp == input_resolution
    output_size = int(ct_size * input_resolution / window_size)
    stride_size = int(input_resolution / output_size)
    kernel_size = input_resolution - (output_size - 1) * stride_size
    P = H * W_sp
    S = output_size * output_size

    # Host-built fused constant (loaded once: constant index_map -> stays resident).
    ptm_np = _build_fused_matrix(H, W_sp, output_size, stride_size, kernel_size, ct_size)
    # bf16 activations go straight to the MXU with f32 accumulation; f32 stays f32.
    op_dtype = jnp.bfloat16 if x_nchw.dtype == jnp.bfloat16 else jnp.float32
    ptm = jnp.asarray(ptm_np, dtype=op_dtype)

    # Free, contiguous reshape: rows = (image, channel), lanes = spatial.
    x_flat = x_nchw.reshape(B * C, P)

    # --- block (images per grid step) selection -------------------------------
    itemsize = jnp.dtype(x_nchw.dtype).itemsize
    per_image = C * P * itemsize
    Bt = max(1, min(B, block_bytes_cap // per_image, max_images_per_block))
    if Bt < B and (Bt * C) % 8 != 0:
        # keep the partially-tiled input block sublane-legal ((8,128) rule)
        while Bt > 1 and (Bt * C) % 8 != 0:
            Bt -= 1
        if (Bt * C) % 8 != 0:
            Bt = B  # single full block (block dims == array dims is always legal)
    num_blocks = pl.cdiv(B, Bt)  # partial last block is masked automatically

    # Per-channel taps / bias, pre-tiled over the images of a block (host-side fold).
    w_bc = jnp.tile(w.reshape(C, 9).T.astype(jnp.float32), (1, Bt))   # (9, Bt*C)
    b_bc = jnp.tile(b.reshape(1, C).astype(jnp.float32), (1, Bt))     # (1, Bt*C)

    # Explicit VMEM budget: double-buffered in/out blocks + resident constants +
    # the (9S, Bt*C) matmul result / epilogue temporaries.
    vmem_need = (2 * Bt * C * P * itemsize
                 + ptm_np.size * jnp.dtype(op_dtype).itemsize
                 + 2 * (9 * S) * (Bt * C) * 4
                 + 2 * Bt * S * C * itemsize
                 + (1 << 20))
    vmem_limit = int(min(max(2 * vmem_need, 32 << 20), 48 << 20))

    kern = functools.partial(_token_init_kernel, S=S, C=C)
    return pl.pallas_call(
        kern,
        out_shape=jax.ShapeDtypeStruct((B, S, C), x_nchw.dtype),
        grid_spec=pltpu.PrefetchScalarGridSpec(
            num_scalar_prefetch=0,
            grid=(num_blocks,),
            in_specs=[
                pl.BlockSpec((Bt * C, P), lambda i: (i, 0)),
                pl.BlockSpec((9 * S, P), lambda i: (0, 0)),
                pl.BlockSpec((9, Bt * C), lambda i: (0, 0)),
                pl.BlockSpec((1, Bt * C), lambda i: (0, 0)),
            ],
            out_specs=pl.BlockSpec((Bt, S, C), lambda i: (i, 0, 0)),
        ),
        compiler_params=pltpu.CompilerParams(
            dimension_semantics=("parallel",),
            vmem_limit_bytes=vmem_limit,
        ),
    )(x_flat, ptm, w_bc, b_bc)


def token_initializer_reference(x_nchw, w, b, *, input_resolution, window_size, ct_size=1):
    """Pure-JAX reference mirroring the PyTorch module exactly."""
    B, C, H, W_sp = x_nchw.shape
    output_size = int(ct_size * input_resolution / window_size)
    stride_size = int(input_resolution / output_size)
    kernel_size = input_resolution - (output_size - 1) * stride_size
    y = lax.conv_general_dilated(
        x_nchw.astype(jnp.float32), w.astype(jnp.float32), (1, 1), ((1, 1), (1, 1)),
        feature_group_count=C, dimension_numbers=("NCHW", "OIHW", "NCHW"))
    y = y + b.astype(jnp.float32).reshape(1, C, 1, 1)
    y = lax.reduce_window(
        y, 0.0, lax.add,
        (1, 1, kernel_size, kernel_size),
        (1, 1, stride_size, stride_size), "VALID") / float(kernel_size * kernel_size)
    Hp, Wp = y.shape[2], y.shape[3]
    ws = ct_size
    ct = y.reshape(B, C, Hp // ws, ws, Wp // ws, ws)
    ct = jnp.transpose(ct, (0, 2, 4, 3, 5, 1)).reshape(-1, Hp * Wp, C)
    return ct


if __name__ == "__main__":
    key = jax.random.PRNGKey(0)

    def run_case(B, dim, input_resolution, window_size, ct_size, cap, k):
        kx, kw, kb = jax.random.split(k, 3)
        x = jax.random.normal(kx, (B, dim, input_resolution, input_resolution), jnp.float32)
        w = jax.random.normal(kw, (dim, 1, 3, 3), jnp.float32) * 0.1
        b = jax.random.normal(kb, (dim,), jnp.float32) * 0.1
        out = token_initializer_forward(
            x, w, b, input_resolution=input_resolution, window_size=window_size,
            ct_size=ct_size, block_bytes_cap=cap)
        out = jax.block_until_ready(out)
        ref = token_initializer_reference(
            x, w, b, input_resolution=input_resolution, window_size=window_size,
            ct_size=ct_size)
        # tolerance covers the MXU's multi-pass f32 rounding on the fused matmul
        np.testing.assert_allclose(np.asarray(out), np.asarray(ref), rtol=2e-3, atol=2e-3)

    k1, k2, k3 = jax.random.split(key, 3)
    # main config: lane-dense C (=128), non-overlapping pool, whole batch in one block
    run_case(B=2, dim=128, input_resolution=16, window_size=8, ct_size=2, cap=8 << 20, k=k1)
    # generality: sub-128 C, overlapping AvgPool (kernel=6, stride=5), one image per step
    run_case(B=3, dim=32, input_resolution=16, window_size=16, ct_size=3, cap=32 * 1024, k=k2)
    # awkward batch: Bt=2 over B=3 -> pl.cdiv grid with a masked partial last block
    run_case(B=3, dim=32, input_resolution=16, window_size=16, ct_size=3, cap=80 * 1024, k=k3)

    print("KERNEL_OK")
</pallas_src>

<mosaic_0001>
module attributes {stable_mosaic.version = 11 : i64} {
  func.func @_token_init_kernel(%arg0: i32, %arg1: memref<256x256xf32, #tpu.memory_space<vmem>>, %arg2: memref<144x256xf32, #tpu.memory_space<vmem>>, %arg3: memref<9x256xf32, #tpu.memory_space<vmem>>, %arg4: memref<1x256xf32, #tpu.memory_space<vmem>>, %arg5: memref<2x16x128xf32, #tpu.memory_space<vmem>>) attributes {dimension_semantics = [#tpu.dimension_semantics<parallel>], iteration_bounds = array<i64: 1>, scalar_prefetch = 0 : i64, scratch_operands = 0 : i64, tpu.core_type = #tpu.core_type<tc>, window_params = [{transform_indices = @transform_0, window_bounds = array<i64: 256, 256>}, {pipeline_mode = #tpu.pipeline_mode<synchronous>, transform_indices = @transform_1, window_bounds = array<i64: 144, 256>}, {pipeline_mode = #tpu.pipeline_mode<synchronous>, transform_indices = @transform_2, window_bounds = array<i64: 9, 256>}, {pipeline_mode = #tpu.pipeline_mode<synchronous>, transform_indices = @transform_3, window_bounds = array<i64: 1, 256>}, {transform_indices = @transform_4, window_bounds = array<i64: 2, 16, 128>}]} {
    %c0 = arith.constant 0 : index
    %c0_0 = arith.constant 0 : index
    %0 = vector.load %arg2[%c0, %c0_0] : memref<144x256xf32, #tpu.memory_space<vmem>>, vector<144x256xf32>
    %c0_1 = arith.constant 0 : index
    %c0_2 = arith.constant 0 : index
    %1 = vector.load %arg1[%c0_1, %c0_2] : memref<256x256xf32, #tpu.memory_space<vmem>>, vector<256x256xf32>
    %cst = arith.constant dense<0.000000e+00> : vector<144x256xf32>
    %2 = tpu.matmul %0, %1, %cst {dimension_numbers = #tpu.dot_dimension_numbers<[1], [1], [0], [0], [0, 0, 1, 0], [], []>} : vector<144x256xf32>, vector<256x256xf32>, vector<144x256xf32> -> vector<144x256xf32>
    %c0_3 = arith.constant 0 : index
    %c0_4 = arith.constant 0 : index
    %3 = vector.load %arg3[%c0_3, %c0_4] : memref<9x256xf32, #tpu.memory_space<vmem>>, vector<9x256xf32>
    %4 = vector.extract_strided_slice %3 {offsets = [0, 0], sizes = [1, 256], strides = [1, 1]} : vector<9x256xf32> to vector<1x256xf32>
    %5 = vector.extract_strided_slice %2 {offsets = [0, 0], sizes = [16, 256], strides = [1, 1]} : vector<144x256xf32> to vector<16x256xf32>
    %6 = vector.broadcast %4 : vector<1x256xf32> to vector<16x256xf32>
    %7 = arith.mulf %6, %5 : vector<16x256xf32>
    %8 = vector.extract_strided_slice %3 {offsets = [1, 0], sizes = [1, 256], strides = [1, 1]} : vector<9x256xf32> to vector<1x256xf32>
    %9 = vector.extract_strided_slice %2 {offsets = [16, 0], sizes = [16, 256], strides = [1, 1]} : vector<144x256xf32> to vector<16x256xf32>
    %10 = vector.broadcast %8 : vector<1x256xf32> to vector<16x256xf32>
    %11 = arith.mulf %10, %9 : vector<16x256xf32>
    %12 = arith.addf %7, %11 : vector<16x256xf32>
    %13 = vector.extract_strided_slice %3 {offsets = [2, 0], sizes = [1, 256], strides = [1, 1]} : vector<9x256xf32> to vector<1x256xf32>
    %14 = vector.extract_strided_slice %2 {offsets = [32, 0], sizes = [16, 256], strides = [1, 1]} : vector<144x256xf32> to vector<16x256xf32>
    %15 = vector.broadcast %13 : vector<1x256xf32> to vector<16x256xf32>
    %16 = arith.mulf %15, %14 : vector<16x256xf32>
    %17 = arith.addf %12, %16 : vector<16x256xf32>
    %18 = vector.extract_strided_slice %3 {offsets = [3, 0], sizes = [1, 256], strides = [1, 1]} : vector<9x256xf32> to vector<1x256xf32>
    %19 = vector.extract_strided_slice %2 {offsets = [48, 0], sizes = [16, 256], strides = [1, 1]} : vector<144x256xf32> to vector<16x256xf32>
    %20 = vector.broadcast %18 : vector<1x256xf32> to vector<16x256xf32>
    %21 = arith.mulf %20, %19 : vector<16x256xf32>
    %22 = arith.addf %17, %21 : vector<16x256xf32>
    %23 = vector.extract_strided_slice %3 {offsets = [4, 0], sizes = [1, 256], strides = [1, 1]} : vector<9x256xf32> to vector<1x256xf32>
    %24 = vector.extract_strided_slice %2 {offsets = [64, 0], sizes = [16, 256], strides = [1, 1]} : vector<144x256xf32> to vector<16x256xf32>
    %25 = vector.broadcast %23 : vector<1x256xf32> to vector<16x256xf32>
    %26 = arith.mulf %25, %24 : vector<16x256xf32>
    %27 = arith.addf %22, %26 : vector<16x256xf32>
    %28 = vector.extract_strided_slice %3 {offsets = [5, 0], sizes = [1, 256], strides = [1, 1]} : vector<9x256xf32> to vector<1x256xf32>
    %29 = vector.extract_strided_slice %2 {offsets = [80, 0], sizes = [16, 256], strides = [1, 1]} : vector<144x256xf32> to vector<16x256xf32>
    %30 = vector.broadcast %28 : vector<1x256xf32> to vector<16x256xf32>
    %31 = arith.mulf %30, %29 : vector<16x256xf32>
    %32 = arith.addf %27, %31 : vector<16x256xf32>
    %33 = vector.extract_strided_slice %3 {offsets = [6, 0], sizes = [1, 256], strides = [1, 1]} : vector<9x256xf32> to vector<1x256xf32>
    %34 = vector.extract_strided_slice %2 {offsets = [96, 0], sizes = [16, 256], strides = [1, 1]} : vector<144x256xf32> to vector<16x256xf32>
    %35 = vector.broadcast %33 : vector<1x256xf32> to vector<16x256xf32>
    %36 = arith.mulf %35, %34 : vector<16x256xf32>
    %37 = arith.addf %32, %36 : vector<16x256xf32>
    %38 = vector.extract_strided_slice %3 {offsets = [7, 0], sizes = [1, 256], strides = [1, 1]} : vector<9x256xf32> to vector<1x256xf32>
    %39 = vector.extract_strided_slice %2 {offsets = [112, 0], sizes = [16, 256], strides = [1, 1]} : vector<144x256xf32> to vector<16x256xf32>
    %40 = vector.broadcast %38 : vector<1x256xf32> to vector<16x256xf32>
    %41 = arith.mulf %40, %39 : vector<16x256xf32>
    %42 = arith.addf %37, %41 : vector<16x256xf32>
    %43 = vector.extract_strided_slice %3 {offsets = [8, 0], sizes = [1, 256], strides = [1, 1]} : vector<9x256xf32> to vector<1x256xf32>
    %44 = vector.extract_strided_slice %2 {offsets = [128, 0], sizes = [16, 256], strides = [1, 1]} : vector<144x256xf32> to vector<16x256xf32>
    %45 = vector.broadcast %43 : vector<1x256xf32> to vector<16x256xf32>
    %46 = arith.mulf %45, %44 : vector<16x256xf32>
    %47 = arith.addf %42, %46 : vector<16x256xf32>
    %c0_5 = arith.constant 0 : index
    %c0_6 = arith.constant 0 : index
    %48 = vector.load %arg4[%c0_5, %c0_6] : memref<1x256xf32, #tpu.memory_space<vmem>>, vector<1x256xf32>
    %49 = vector.broadcast %48 : vector<1x256xf32> to vector<16x256xf32>
    %50 = arith.addf %47, %49 : vector<16x256xf32>
    %51 = vector.extract_strided_slice %50 {offsets = [0, 0], sizes = [16, 128], strides = [1, 1]} : vector<16x256xf32> to vector<16x128xf32>
    %c0_7 = arith.constant 0 : index
    %c0_8 = arith.constant 0 : index
    %c0_9 = arith.constant 0 : index
    %52 = vector.load %arg5[%c0_7, %c0_8, %c0_9] : memref<2x16x128xf32, #tpu.memory_space<vmem>>, vector<1x16x128xf32>
    %53 = vector.shape_cast %52 : vector<1x16x128xf32> to vector<16x128xf32>
    %54 = vector.shape_cast %51 : vector<16x128xf32> to vector<1x16x128xf32>
    tpu.vector_store %arg5[%c0_7, %c0_8, %c0_9], %54 {strides = array<i32>} : memref<2x16x128xf32, #tpu.memory_space<vmem>>, vector<1x16x128xf32>,
    %55 = vector.extract_strided_slice %50 {offsets = [0, 128], sizes = [16, 128], strides = [1, 1]} : vector<16x256xf32> to vector<16x128xf32>
    %c1 = arith.constant 1 : index
    %c0_10 = arith.constant 0 : index
    %c0_11 = arith.constant 0 : index
    %56 = vector.load %arg5[%c1, %c0_10, %c0_11] : memref<2x16x128xf32, #tpu.memory_space<vmem>>, vector<1x16x128xf32>
    %57 = vector.shape_cast %56 : vector<1x16x128xf32> to vector<16x128xf32>
    %58 = vector.shape_cast %55 : vector<16x128xf32> to vector<1x16x128xf32>
    tpu.vector_store %arg5[%c1, %c0_10, %c0_11], %58 {strides = array<i32>} : memref<2x16x128xf32, #tpu.memory_space<vmem>>, vector<1x16x128xf32>,
    return
  }
  func.func @transform_0(%arg0: i32) -> (i32, i32) {
    %c0_i32 = arith.constant 0 : i32
    %c0_i32_0 = arith.constant 0 : i32
    return %arg0, %c0_i32 : i32, i32
  }
  func.func @transform_1(%arg0: i32) -> (i32, i32) {
    %c0_i32 = arith.constant 0 : i32
    %c0_i32_0 = arith.constant 0 : i32
    %c0_i32_1 = arith.constant 0 : i32
    return %c0_i32, %c0_i32_0 : i32, i32
  }
  func.func @transform_2(%arg0: i32) -> (i32, i32) {
    %c0_i32 = arith.constant 0 : i32
    %c0_i32_0 = arith.constant 0 : i32
    %c0_i32_1 = arith.constant 0 : i32
    return %c0_i32, %c0_i32_0 : i32, i32
  }
  func.func @transform_3(%arg0: i32) -> (i32, i32) {
    %c0_i32 = arith.constant 0 : i32
    %c0_i32_0 = arith.constant 0 : i32
    %c0_i32_1 = arith.constant 0 : i32
    return %c0_i32, %c0_i32_0 : i32, i32
  }
  func.func @transform_4(%arg0: i32) -> (i32, i32, i32) {
    %c0_i32 = arith.constant 0 : i32
    %c0_i32_0 = arith.constant 0 : i32
    %c0_i32_1 = arith.constant 0 : i32
    return %arg0, %c0_i32, %c0_i32_0 : i32, i32, i32
  }
}

</mosaic_0001>

<llo_original>
// kernel: tpu_custom_call.1
$region0: #{tpu_custom_call.1}
  #allocation0 [shape = 'u32[]', space=smem, size = 0x4, offset = 0x4, fixed_abs, tag = 'smem constant byte address 0x4 - core index']
  #allocation1 [shape = 'u32[144,128]{1,0:T(1,128)}', space=vmem, size = 0x12000, scoped, tag = 'internal scratch']
  %s0 = inlined_call_operand.hbm [shape: f32[256,256], index: 0, kind: input, shape index: {}]
  %s1 = inlined_call_operand.hbm [shape: f32[144,256], index: 1, kind: input, shape index: {}]
  %s2 = inlined_call_operand.hbm [shape: f32[9,256], index: 2, kind: input, shape index: {}]
  %s3 = inlined_call_operand.vmem [shape: f32[1,256], index: 3, kind: input, shape index: {}]
  %s4 = inlined_call_operand.hbm [shape: f32[2,16,128], index: 4, kind: output, shape index: {}]
  %s5 = sld [smem:[#allocation0]]
  $region38: #{tpu_custom_call.1} parent=0
    _
  %s7 = ssub.s32 1, %s5
  %s8 = scalar_select 0, %s7, %s5
  $region1: #{tpu_custom_call.1} parent=0
    #allocation2 [shape = 'u8[262144]{0}', space=vmem, size = 0x40000, scoped, tag = 'input window, operand 0, single buffered']
    #allocation3 [shape = 's32[1]{0}', space=sflag, size = 0x4, scoped, tag = 'scoped memory for tpu_custom_call.1']
    #allocation4 [shape = 's32[1]{0}', space=sflag, size = 0x4, scoped, tag = 'scoped memory for tpu_custom_call.1']
    #allocation5 [shape = 'u8[147456]{0}', space=vmem, size = 0x24000, scoped, tag = 'input window, operand 1, single buffered']
    #allocation6 [shape = 's32[1]{0}', space=sflag, size = 0x4, scoped, tag = 'scoped memory for tpu_custom_call.1']
    #allocation7 [shape = 'u8[16384]{0}', space=vmem, size = 0x4000, scoped, tag = 'input window, operand 2, single buffered']
    #allocation8 [shape = 'u8[16384]{0}', space=vmem, size = 0x4000, scoped, tag = 'output window, operand 0, single buffered']
    %9 = vsyncpa [#allocation3], 0
    %10 = vsyncpa [#allocation6], 0
    %11 = vsyncpa [#allocation4], 0
    // Predicated region
    $region2: #{tpu_custom_call.1} parent=1 // pred_check
      _
    $region3: #{tpu_custom_call.1} parent=1 // pred_check_branch
      %13 = sbr.rel (0) target = $region5
    $region4: #{tpu_custom_call.1} parent=1 // pred_region
      %s15 = ssub.s32 8192, 8192
      %16 = vsyncadd [#allocation3], %s15
      %s17 = sshll.u32 [#allocation2], 4
      %s18 = int_to_ptr.vmem [resolvable:$true] %s17
      %23 = dma.hbm_to_vmem [thread:$0]  %s0, 8192, %s18, [#allocation3], 256, 256, 16
    $region5: #{tpu_custom_call.1} parent=1 // pred_fallthru
      _
    // Predicated region
    $region6: #{tpu_custom_call.1} parent=1 // pred_check
      _
    $region7: #{tpu_custom_call.1} parent=1 // pred_check_branch
      %25 = sbr.rel (0) target = $region9
    $region8: #{tpu_custom_call.1} parent=1 // pred_region
      %s27 = ssub.s32 4608, 4608
      %28 = vsyncadd [#allocation6], %s27
      %s29 = sshll.u32 [#allocation5], 4
      %s30 = int_to_ptr.vmem [resolvable:$true] %s29
      %35 = dma.hbm_to_vmem [thread:$0]  %s1, 4608, %s30, [#allocation6], 256, 256, 16
    $region9: #{tpu_custom_call.1} parent=1 // pred_fallthru
      _
    // Predicated region
    $region10: #{tpu_custom_call.1} parent=1 // pred_check
      _
    $region11: #{tpu_custom_call.1} parent=1 // pred_check_branch
      %37 = sbr.rel (0) target = $region13
    $region12: #{tpu_custom_call.1} parent=1 // pred_region
      %s39 = ssub.s32 512, 512
      %40 = vsyncadd [#allocation6], %s39
      %s41 = sshll.u32 [#allocation7], 4
      %s42 = int_to_ptr.vmem [resolvable:$true] %s41
      %47 = dma.hbm_to_vmem [thread:$0]  %s2, 512, %s42, [#allocation6], 256, 256, 16
    $region13: #{tpu_custom_call.1} parent=1 // pred_fallthru
      _
    // Predicated region
    $region14: #{tpu_custom_call.1} parent=1 // pred_check
      _
    $region15: #{tpu_custom_call.1} parent=1 // pred_check_branch
      %49 = sbr.rel (0) target = $region17
    $region16: #{tpu_custom_call.1} parent=1 // pred_region
      _
    $region17: #{tpu_custom_call.1} parent=1 // pred_fallthru
      _
    // Predicated region
    $region18: #{tpu_custom_call.1} parent=1 // pred_check
      _
    $region19: #{tpu_custom_call.1} parent=1 // pred_check_branch
      %51 = sbr.rel (0) target = $region21
    $region20: #{tpu_custom_call.1} parent=1 // pred_region
      %52 = dma.done [#allocation3], 8192
    $region21: #{tpu_custom_call.1} parent=1 // pred_fallthru
      _
    // Predicated region
    $region22: #{tpu_custom_call.1} parent=1 // pred_check
      _
    $region23: #{tpu_custom_call.1} parent=1 // pred_check_branch
      %54 = sbr.rel (0) target = $region25
    $region24: #{tpu_custom_call.1} parent=1 // pred_region
      %55 = dma.done [#allocation6], 4608
    $region25: #{tpu_custom_call.1} parent=1 // pred_fallthru
      _
    // Predicated region
    $region26: #{tpu_custom_call.1} parent=1 // pred_check
      _
    $region27: #{tpu_custom_call.1} parent=1 // pred_check_branch
      %57 = sbr.rel (0) target = $region29
    $region28: #{tpu_custom_call.1} parent=1 // pred_region
      %58 = dma.done [#allocation6], 512
    $region29: #{tpu_custom_call.1} parent=1 // pred_fallthru
      _
    %v59 = vld [vmem:[#allocation5] sm:$0xff]
    %v60 = vld [vmem:[#allocation5 + $0x8] sm:$0xff]
    %v61 = vld [vmem:[#allocation5 + $0x10] sm:$0xff]
    %v62 = vld [vmem:[#allocation5 + $0x18] sm:$0xff]
    %v63 = vld [vmem:[#allocation5 + $0x20] sm:$0xff]
    %v64 = vld [vmem:[#allocation5 + $0x28] sm:$0xff]
    %v65 = vld [vmem:[#allocation5 + $0x30] sm:$0xff]
    %v66 = vld [vmem:[#allocation5 + $0x38] sm:$0xff]
    %v67 = vld [vmem:[#allocation5 + $0x40] sm:$0xff]
    %v68 = vld [vmem:[#allocation5 + $0x48] sm:$0xff]
    %v69 = vld [vmem:[#allocation5 + $0x50] sm:$0xff]
    %v70 = vld [vmem:[#allocation5 + $0x58] sm:$0xff]
    %v71 = vld [vmem:[#allocation5 + $0x60] sm:$0xff]
    %v72 = vld [vmem:[#allocation5 + $0x68] sm:$0xff]
    %v73 = vld [vmem:[#allocation5 + $0x70] sm:$0xff]
    %v74 = vld [vmem:[#allocation5 + $0x78] sm:$0xff]
    %v75 = vld [vmem:[#allocation5 + $0x80] sm:$0xff]
    %v76 = vld [vmem:[#allocation5 + $0x88] sm:$0xff]
    %v77 = vld [vmem:[#allocation5 + $0x90] sm:$0xff]
    %v78 = vld [vmem:[#allocation5 + $0x98] sm:$0xff]
    %v79 = vld [vmem:[#allocation5 + $0xa0] sm:$0xff]
    %v80 = vld [vmem:[#allocation5 + $0xa8] sm:$0xff]
    %v81 = vld [vmem:[#allocation5 + $0xb0] sm:$0xff]
    %v82 = vld [vmem:[#allocation5 + $0xb8] sm:$0xff]
    %v83 = vld [vmem:[#allocation5 + $0xc0] sm:$0xff]
    %v84 = vld [vmem:[#allocation5 + $0xc8] sm:$0xff]
    %v85 = vld [vmem:[#allocation5 + $0xd0] sm:$0xff]
    %v86 = vld [vmem:[#allocation5 + $0xd8] sm:$0xff]
    %v87 = vld [vmem:[#allocation5 + $0xe0] sm:$0xff]
    %v88 = vld [vmem:[#allocation5 + $0xe8] sm:$0xff]
    %v89 = vld [vmem:[#allocation5 + $0xf0] sm:$0xff]
    %v90 = vld [vmem:[#allocation5 + $0xf8] sm:$0xff]
    %v91 = vld [vmem:[#allocation5 + $0x100] sm:$0xff]
    %v92 = vld [vmem:[#allocation5 + $0x108] sm:$0xff]
    %v93 = vld [vmem:[#allocation5 + $0x110] sm:$0xff]
    %v94 = vld [vmem:[#allocation5 + $0x118] sm:$0xff]
    %v95 = vld [vmem:[#allocation2] sm:$0xff]
    %v96 = vld [vmem:[#allocation2 + $0x8] sm:$0xff]
    %v97 = vld [vmem:[#allocation2 + $0x10] sm:$0xff]
    %v98 = vld [vmem:[#allocation2 + $0x18] sm:$0xff]
    %v99 = vld [vmem:[#allocation2 + $0x20] sm:$0xff]
    %v100 = vld [vmem:[#allocation2 + $0x28] sm:$0xff]
    %v101 = vld [vmem:[#allocation2 + $0x30] sm:$0xff]
    %v102 = vld [vmem:[#allocation2 + $0x38] sm:$0xff]
    %v103 = vld [vmem:[#allocation2 + $0x40] sm:$0xff]
    %v104 = vld [vmem:[#allocation2 + $0x48] sm:$0xff]
    %v105 = vld [vmem:[#allocation2 + $0x50] sm:$0xff]
    %v106 = vld [vmem:[#allocation2 + $0x58] sm:$0xff]
    %v107 = vld [vmem:[#allocation2 + $0x60] sm:$0xff]
    %v108 = vld [vmem:[#allocation2 + $0x68] sm:$0xff]
    %v109 = vld [vmem:[#allocation2 + $0x70] sm:$0xff]
    %v110 = vld [vmem:[#allocation2 + $0x78] sm:$0xff]
    %v111 = vld [vmem:[#allocation2 + $0x80] sm:$0xff]
    %v112 = vld [vmem:[#allocation2 + $0x88] sm:$0xff]
    %v113 = vld [vmem:[#allocation2 + $0x90] sm:$0xff]
    %v114 = vld [vmem:[#allocation2 + $0x98] sm:$0xff]
    %v115 = vld [vmem:[#allocation2 + $0xa0] sm:$0xff]
    %v116 = vld [vmem:[#allocation2 + $0xa8] sm:$0xff]
    %v117 = vld [vmem:[#allocation2 + $0xb0] sm:$0xff]
    %v118 = vld [vmem:[#allocation2 + $0xb8] sm:$0xff]
    %v119 = vld [vmem:[#allocation2 + $0xc0] sm:$0xff]
    %v120 = vld [vmem:[#allocation2 + $0xc8] sm:$0xff]
    %v121 = vld [vmem:[#allocation2 + $0xd0] sm:$0xff]
    %v122 = vld [vmem:[#allocation2 + $0xd8] sm:$0xff]
    %v123 = vld [vmem:[#allocation2 + $0xe0] sm:$0xff]
    %v124 = vld [vmem:[#allocation2 + $0xe8] sm:$0xff]
    %v125 = vld [vmem:[#allocation2 + $0xf0] sm:$0xff]
    %v126 = vld [vmem:[#allocation2 + $0xf8] sm:$0xff]
    %v127 = vld [vmem:[#allocation2 + $0x100] sm:$0xff]
    %v128 = vld [vmem:[#allocation2 + $0x108] sm:$0xff]
    %v129 = vld [vmem:[#allocation2 + $0x110] sm:$0xff]
    %v130 = vld [vmem:[#allocation2 + $0x118] sm:$0xff]
    %v131 = vld [vmem:[#allocation2 + $0x120] sm:$0xff]
    %v132 = vld [vmem:[#allocation2 + $0x128] sm:$0xff]
    %v133 = vld [vmem:[#allocation2 + $0x130] sm:$0xff]
    %v134 = vld [vmem:[#allocation2 + $0x138] sm:$0xff]
    %v135 = vld [vmem:[#allocation2 + $0x140] sm:$0xff]
    %v136 = vld [vmem:[#allocation2 + $0x148] sm:$0xff]
    %v137 = vld [vmem:[#allocation2 + $0x150] sm:$0xff]
    %v138 = vld [vmem:[#allocation2 + $0x158] sm:$0xff]
    %v139 = vld [vmem:[#allocation2 + $0x160] sm:$0xff]
    %v140 = vld [vmem:[#allocation2 + $0x168] sm:$0xff]
    %v141 = vld [vmem:[#allocation2 + $0x170] sm:$0xff]
    %v142 = vld [vmem:[#allocation2 + $0x178] sm:$0xff]
    %v143 = vld [vmem:[#allocation2 + $0x180] sm:$0xff]
    %v144 = vld [vmem:[#allocation2 + $0x188] sm:$0xff]
    %v145 = vld [vmem:[#allocation2 + $0x190] sm:$0xff]
    %v146 = vld [vmem:[#allocation2 + $0x198] sm:$0xff]
    %v147 = vld [vmem:[#allocation2 + $0x1a0] sm:$0xff]
    %v148 = vld [vmem:[#allocation2 + $0x1a8] sm:$0xff]
    %v149 = vld [vmem:[#allocation2 + $0x1b0] sm:$0xff]
    %v150 = vld [vmem:[#allocation2 + $0x1b8] sm:$0xff]
    %v151 = vld [vmem:[#allocation2 + $0x1c0] sm:$0xff]
    %v152 = vld [vmem:[#allocation2 + $0x1c8] sm:$0xff]
    %v153 = vld [vmem:[#allocation2 + $0x1d0] sm:$0xff]
    %v154 = vld [vmem:[#allocation2 + $0x1d8] sm:$0xff]
    %v155 = vld [vmem:[#allocation2 + $0x1e0] sm:$0xff]
    %v156 = vld [vmem:[#allocation2 + $0x1e8] sm:$0xff]
    %v157 = vld [vmem:[#allocation2 + $0x1f0] sm:$0xff]
    %v158 = vld [vmem:[#allocation2 + $0x1f8] sm:$0xff]
    %159 = vmatprep.subr.mxu0 %v96
    %160 = vmatpush1.xpose.msra.mxu0 %v95
    %161 = vmatprep.subr.mxu0 %v98
    %162 = vmatpush1.xpose.msra.mxu0 %v97
    %163 = vmatprep.subr.mxu0 %v100
    %164 = vmatpush1.xpose.msra.mxu0 %v99
    %165 = vmatprep.subr.mxu0 %v102
    %166 = vmatpush1.xpose.msra.mxu0 %v101
    %167 = vmatprep.subr.mxu0 %v104
    %168 = vmatpush1.xpose.msra.mxu0 %v103
    %169 = vmatprep.subr.mxu0 %v106
    %170 = vmatpush1.xpose.msra.mxu0 %v105
    %171 = vmatprep.subr.mxu0 %v108
    %172 = vmatpush1.xpose.msra.mxu0 %v107
    %173 = vmatprep.subr.mxu0 %v110
    %174 = vmatpush1.xpose.msra.mxu0 %v109
    %175 = vmatprep.subr.mxu0 %v112
    %176 = vmatpush1.xpose.msra.mxu0 %v111
    %177 = vmatprep.subr.mxu0 %v114
    %178 = vmatpush1.xpose.msra.mxu0 %v113
    %179 = vmatprep.subr.mxu0 %v116
    %180 = vmatpush1.xpose.msra.mxu0 %v115
    %181 = vmatprep.subr.mxu0 %v118
    %182 = vmatpush1.xpose.msra.mxu0 %v117
    %183 = vmatprep.subr.mxu0 %v120
    %184 = vmatpush1.xpose.msra.mxu0 %v119
    %185 = vmatprep.subr.mxu0 %v122
    %186 = vmatpush1.xpose.msra.mxu0 %v121
    %187 = vmatprep.subr.mxu0 %v124
    %188 = vmatpush1.xpose.msra.mxu0 %v123
    %189 = vmatprep.subr.mxu0 %v126
    %190 = vmatpush1.xpose.msra.mxu0 %v125
    %191 = vmatprep.subr.mxu0 %v128
    %192 = vmatpush1.xpose.msra.mxu0 %v127
    %193 = vmatprep.subr.mxu0 %v130
    %194 = vmatpush1.xpose.msra.mxu0 %v129
    %195 = vmatprep.subr.mxu0 %v132
    %196 = vmatpush1.xpose.msra.mxu0 %v131
    %197 = vmatprep.subr.mxu0 %v134
    %198 = vmatpush1.xpose.msra.mxu0 %v133
    %199 = vmatprep.subr.mxu0 %v136
    %200 = vmatpush1.xpose.msra.mxu0 %v135
    %201 = vmatprep.subr.mxu0 %v138
    %202 = vmatpush1.xpose.msra.mxu0 %v137
    %203 = vmatprep.subr.mxu0 %v140
    %204 = vmatpush1.xpose.msra.mxu0 %v139
    %205 = vmatprep.subr.mxu0 %v142
    %206 = vmatpush1.xpose.msra.mxu0 %v141
    %207 = vmatprep.subr.mxu0 %v144
    %208 = vmatpush1.xpose.msra.mxu0 %v143
    %209 = vmatprep.subr.mxu0 %v146
    %210 = vmatpush1.xpose.msra.mxu0 %v145
    %211 = vmatprep.subr.mxu0 %v148
    %212 = vmatpush1.xpose.msra.mxu0 %v147
    %213 = vmatprep.subr.mxu0 %v150
    %214 = vmatpush1.xpose.msra.mxu0 %v149
    %215 = vmatprep.subr.mxu0 %v152
    %216 = vmatpush1.xpose.msra.mxu0 %v151
    %217 = vmatprep.subr.mxu0 %v154
    %218 = vmatpush1.xpose.msra.mxu0 %v153
    %219 = vmatprep.subr.mxu0 %v156
    %220 = vmatpush1.xpose.msra.mxu0 %v155
    %221 = vmatprep.subr.mxu0 %v158
    %222 = vmatpush1.xpose.msra.mxu0 %v157
    %223 = vmatprep.mubr.f32.mxu0 %v60
    %224 = vmatmul.mubr.f32.gmra.mrb[0].mxu0 %v59
    %v225 = vpop.f32.mrb[0].mxu0
    %v226 = vadd.f32 0.0, %v225
    %v227 = vpop.f32.mrb[0].mxu0
    %v228 = vadd.f32 0.0, %v227
    %229 = vmatprep.mubr.f32.mxu0 %v62
    %230 = vmatmul.mubr.f32.gmra.mrb[0].mxu0 %v61
    %v231 = vpop.f32.mrb[0].mxu0
    %v232 = vadd.f32 0.0, %v231
    %v233 = vpop.f32.mrb[0].mxu0
    %v234 = vadd.f32 0.0, %v233
    %235 = vmatprep.mubr.f32.mxu0 %v64
    %236 = vmatmul.mubr.f32.gmra.mrb[0].mxu0 %v63
    %v237 = vpop.f32.mrb[0].mxu0
    %v238 = vadd.f32 0.0, %v237
    %v239 = vpop.f32.mrb[0].mxu0
    %v240 = vadd.f32 0.0, %v239
    %241 = vmatprep.mubr.f32.mxu0 %v66
    %242 = vmatmul.mubr.f32.gmra.mrb[0].mxu0 %v65
    %v243 = vpop.f32.mrb[0].mxu0
    %v244 = vadd.f32 0.0, %v243
    %v245 = vpop.f32.mrb[0].mxu0
    %v246 = vadd.f32 0.0, %v245
    %247 = vmatprep.mubr.f32.mxu0 %v68
    %248 = vmatmul.mubr.f32.gmra.mrb[0].mxu0 %v67
    %v249 = vpop.f32.mrb[0].mxu0
    %v250 = vadd.f32 0.0, %v249
    %v251 = vpop.f32.mrb[0].mxu0
    %v252 = vadd.f32 0.0, %v251
    %253 = vmatprep.mubr.f32.mxu0 %v70
    %254 = vmatmul.mubr.f32.gmra.mrb[0].mxu0 %v69
    %v255 = vpop.f32.mrb[0].mxu0
    %v256 = vadd.f32 0.0, %v255
    %v257 = vpop.f32.mrb[0].mxu0
    %v258 = vadd.f32 0.0, %v257
    %259 = vmatprep.mubr.f32.mxu0 %v72
    %260 = vmatmul.mubr.f32.gmra.mrb[0].mxu0 %v71
    %v261 = vpop.f32.mrb[0].mxu0
    %v262 = vadd.f32 0.0, %v261
    %v263 = vpop.f32.mrb[0].mxu0
    %v264 = vadd.f32 0.0, %v263
    %265 = vmatprep.mubr.f32.mxu0 %v74
    %266 = vmatmul.mubr.f32.gmra.mrb[0].mxu0 %v73
    %v267 = vpop.f32.mrb[0].mxu0
    %v268 = vadd.f32 0.0, %v267
    %v269 = vpop.f32.mrb[0].mxu0
    %v270 = vadd.f32 0.0, %v269
    %271 = vmatprep.mubr.f32.mxu0 %v76
    %272 = vmatmul.mubr.f32.gmra.mrb[0].mxu0 %v75
    %v273 = vpop.f32.mrb[0].mxu0
    %v274 = vadd.f32 0.0, %v273
    %v275 = vpop.f32.mrb[0].mxu0
    %v276 = vadd.f32 0.0, %v275
    %277 = vmatprep.mubr.f32.mxu0 %v78
    %278 = vmatmul.mubr.f32.gmra.mrb[0].mxu0 %v77
    %v279 = vpop.f32.mrb[0].mxu0
    %v280 = vadd.f32 0.0, %v279
    %v281 = vpop.f32.mrb[0].mxu0
    %v282 = vadd.f32 0.0, %v281
    %283 = vmatprep.mubr.f32.mxu0 %v80
    %284 = vmatmul.mubr.f32.gmra.mrb[0].mxu0 %v79
    %v285 = vpop.f32.mrb[0].mxu0
    %v286 = vadd.f32 0.0, %v285
    %v287 = vpop.f32.mrb[0].mxu0
    %v288 = vadd.f32 0.0, %v287
    %289 = vmatprep.mubr.f32.mxu0 %v82
    %290 = vmatmul.mubr.f32.gmra.mrb[0].mxu0 %v81
    %v291 = vpop.f32.mrb[0].mxu0
    %v292 = vadd.f32 0.0, %v291
    %v293 = vpop.f32.mrb[0].mxu0
    %v294 = vadd.f32 0.0, %v293
    %295 = vmatprep.mubr.f32.mxu0 %v84
    %296 = vmatmul.mubr.f32.gmra.mrb[0].mxu0 %v83
    %v297 = vpop.f32.mrb[0].mxu0
    %v298 = vadd.f32 0.0, %v297
    %v299 = vpop.f32.mrb[0].mxu0
    %v300 = vadd.f32 0.0, %v299
    %301 = vmatprep.mubr.f32.mxu0 %v86
    %302 = vmatmul.mubr.f32.gmra.mrb[0].mxu0 %v85
    %v303 = vpop.f32.mrb[0].mxu0
    %v304 = vadd.f32 0.0, %v303
    %v305 = vpop.f32.mrb[0].mxu0
    %v306 = vadd.f32 0.0, %v305
    %307 = vmatprep.mubr.f32.mxu0 %v88
    %308 = vmatmul.mubr.f32.gmra.mrb[0].mxu0 %v87
    %v309 = vpop.f32.mrb[0].mxu0
    %v310 = vadd.f32 0.0, %v309
    %v311 = vpop.f32.mrb[0].mxu0
    %v312 = vadd.f32 0.0, %v311
    %313 = vmatprep.mubr.f32.mxu0 %v90
    %314 = vmatmul.mubr.f32.gmra.mrb[0].mxu0 %v89
    %v315 = vpop.f32.mrb[0].mxu0
    %v316 = vadd.f32 0.0, %v315
    %v317 = vpop.f32.mrb[0].mxu0
    %v318 = vadd.f32 0.0, %v317
    %319 = vmatprep.mubr.f32.mxu0 %v92
    %320 = vmatmul.mubr.f32.gmra.mrb[0].mxu0 %v91
    %v321 = vpop.f32.mrb[0].mxu0
    %v322 = vadd.f32 0.0, %v321
    %v323 = vpop.f32.mrb[0].mxu0
    %v324 = vadd.f32 0.0, %v323
    %325 = vmatprep.mubr.f32.mxu0 %v94
    %326 = vmatmul.mubr.f32.gmra.mrb[0].mxu0 %v93
    %v327 = vpop.f32.mrb[0].mxu0
    %v328 = vadd.f32 0.0, %v327
    %v329 = vpop.f32.mrb[0].mxu0
    %v330 = vadd.f32 0.0, %v329
    %331 = vdwg.mxu0
    %v332 = vld [vmem:[#allocation7] sm:$0xff]
    %v333 = vld [vmem:[#allocation7 + $0x8] sm:$0xff]
    %v334 = vld [vmem:[#allocation7 + $0x10] sm:$0x1]
    %v335 = vld [vmem:[#allocation7 + $0x18] sm:$0x1]
    %v336 = vlaneseq
    %v337 = vshrl.u32 %v336, 7
    %v338 = vsub.s32 0, %v337
    %v339 = vrot.slane %v332, %v338
    %v340 = vlaneseq
    %v341 = vshrl.u32 %v340, 7
    %v342 = vsub.s32 0, %v341
    %v343 = vrot.slane %v333, %v342
    %v344 = vmul.f32 %v339, %v226
    %v345 = vmul.f32 %v343, %v228
    %v346 = vmul.f32 %v339, %v232
    %v347 = vmul.f32 %v343, %v234
    %v348 = vlaneseq
    %v349 = vshrl.u32 %v348, 7
    %v350 = vsub.s32 1, %v349
    %v351 = vrot.slane %v332, %v350
    %v352 = vlaneseq
    %v353 = vshrl.u32 %v352, 7
    %v354 = vsub.s32 1, %v353
    %v355 = vrot.slane %v333, %v354
    %v356 = vmul.f32 %v351, %v238
    %v357 = vmul.f32 %v355, %v240
    %v358 = vmul.f32 %v351, %v244
    %v359 = vmul.f32 %v355, %v246
    %v360 = vadd.f32 %v344, %v356
    %v361 = vadd.f32 %v345, %v357
    %v362 = vadd.f32 %v346, %v358
    %v363 = vadd.f32 %v347, %v359
    %v364 = vlaneseq
    %v365 = vshrl.u32 %v364, 7
    %v366 = vsub.s32 2, %v365
    %v367 = vrot.slane %v332, %v366
    %v368 = vlaneseq
    %v369 = vshrl.u32 %v368, 7
    %v370 = vsub.s32 2, %v369
    %v371 = vrot.slane %v333, %v370
    %v372 = vmul.f32 %v367, %v250
    %v373 = vmul.f32 %v371, %v252
    %v374 = vmul.f32 %v367, %v256
    %v375 = vmul.f32 %v371, %v258
    %v376 = vadd.f32 %v360, %v372
    %v377 = vadd.f32 %v361, %v373
    %v378 = vadd.f32 %v362, %v374
    %v379 = vadd.f32 %v363, %v375
    %v380 = vlaneseq
    %v381 = vshrl.u32 %v380, 7
    %v382 = vsub.s32 3, %v381
    %v383 = vrot.slane %v332, %v382
    %v384 = vlaneseq
    %v385 = vshrl.u32 %v384, 7
    %v386 = vsub.s32 3, %v385
    %v387 = vrot.slane %v333, %v386
    %v388 = vmul.f32 %v383, %v262
    %v389 = vmul.f32 %v387, %v264
    %v390 = vmul.f32 %v383, %v268
    %v391 = vmul.f32 %v387, %v270
    %v392 = vadd.f32 %v376, %v388
    %v393 = vadd.f32 %v377, %v389
    %v394 = vadd.f32 %v378, %v390
    %v395 = vadd.f32 %v379, %v391
    %v396 = vlaneseq
    %v397 = vshrl.u32 %v396, 7
    %v398 = vsub.s32 4, %v397
    %v399 = vrot.slane %v332, %v398
    %v400 = vlaneseq
    %v401 = vshrl.u32 %v400, 7
    %v402 = vsub.s32 4, %v401
    %v403 = vrot.slane %v333, %v402
    %v404 = vmul.f32 %v399, %v274
    %v405 = vmul.f32 %v403, %v276
    %v406 = vmul.f32 %v399, %v280
    %v407 = vmul.f32 %v403, %v282
    %v408 = vadd.f32 %v392, %v404
    %v409 = vadd.f32 %v393, %v405
    %v410 = vadd.f32 %v394, %v406
    %v411 = vadd.f32 %v395, %v407
    %v412 = vlaneseq
    %v413 = vshrl.u32 %v412, 7
    %v414 = vsub.s32 5, %v413
    %v415 = vrot.slane %v332, %v414
    %v416 = vlaneseq
    %v417 = vshrl.u32 %v416, 7
    %v418 = vsub.s32 5, %v417
    %v419 = vrot.slane %v333, %v418
    %v420 = vmul.f32 %v415, %v286
    %v421 = vmul.f32 %v419, %v288
    %v422 = vmul.f32 %v415, %v292
    %v423 = vmul.f32 %v419, %v294
    %v424 = vadd.f32 %v408, %v420
    %v425 = vadd.f32 %v409, %v421
    %v426 = vadd.f32 %v410, %v422
    %v427 = vadd.f32 %v411, %v423
    %v428 = vlaneseq
    %v429 = vshrl.u32 %v428, 7
    %v430 = vsub.s32 6, %v429
    %v431 = vrot.slane %v332, %v430
    %v432 = vlaneseq
    %v433 = vshrl.u32 %v432, 7
    %v434 = vsub.s32 6, %v433
    %v435 = vrot.slane %v333, %v434
    %v436 = vmul.f32 %v431, %v298
    %v437 = vmul.f32 %v435, %v300
    %v438 = vmul.f32 %v431, %v304
    %v439 = vmul.f32 %v435, %v306
    %v440 = vadd.f32 %v424, %v436
    %v441 = vadd.f32 %v425, %v437
    %v442 = vadd.f32 %v426, %v438
    %v443 = vadd.f32 %v427, %v439
    %v444 = vlaneseq
    %v445 = vshrl.u32 %v444, 7
    %v446 = vsub.s32 7, %v445
    %v447 = vrot.slane %v332, %v446
    %v448 = vlaneseq
    %v449 = vshrl.u32 %v448, 7
    %v450 = vsub.s32 7, %v449
    %v451 = vrot.slane %v333, %v450
    %v452 = vmul.f32 %v447, %v310
    %v453 = vmul.f32 %v451, %v312
    %v454 = vmul.f32 %v447, %v316
    %v455 = vmul.f32 %v451, %v318
    %v456 = vadd.f32 %v440, %v452
    %v457 = vadd.f32 %v441, %v453
    %v458 = vadd.f32 %v442, %v454
    %v459 = vadd.f32 %v443, %v455
    %v460 = vlaneseq
    %v461 = vshrl.u32 %v460, 7
    %v462 = vsub.s32 0, %v461
    %v463 = vrot.slane %v334, %v462
    %v464 = vlaneseq
    %v465 = vshrl.u32 %v464, 7
    %v466 = vsub.s32 0, %v465
    %v467 = vrot.slane %v335, %v466
    %v468 = vmul.f32 %v463, %v322
    %v469 = vmul.f32 %v467, %v324
    %v470 = vmul.f32 %v463, %v328
    %v471 = vmul.f32 %v467, %v330
    %v472 = vadd.f32 %v456, %v468
    %v473 = vadd.f32 %v457, %v469
    %v474 = vadd.f32 %v458, %v470
    %v475 = vadd.f32 %v459, %v471
    %v476 = vld [vmem:[%s3] sm:$0x3]
    %v478 = vlaneseq
    %v479 = vshrl.u32 %v478, 7
    %v480 = vsub.s32 0, %v479
    %v481 = vrot.slane %v476, %v480
    %v482 = vlaneseq
    %v483 = vshrl.u32 %v482, 7
    %v484 = vsub.s32 1, %v483
    %v485 = vrot.slane %v476, %v484
    %v488 = vadd.f32 %v472, %v481
    %v489 = vadd.f32 %v473, %v485
    %v490 = vadd.f32 %v474, %v481
    %v491 = vadd.f32 %v475, %v485
    %492 = vst [vmem:[#allocation8] sm:$0xff] %v488
    %493 = vst [vmem:[#allocation8 + $0x8] sm:$0xff] %v490
    %s494 = scalar_lea.vmem [#allocation8], 16
    %495 = vst [vmem:[%s494] sm:$0xff] %v489
    %496 = vst [vmem:[%s494 + $0x8] sm:$0xff] %v491
    // Predicated region
    $region30: #{tpu_custom_call.1} parent=1 // pred_check
      _
    $region31: #{tpu_custom_call.1} parent=1 // pred_check_branch
      %498 = sbr.rel (0) target = $region33
    $region32: #{tpu_custom_call.1} parent=1 // pred_region
      %s500 = ssub.s32 512, 512
      %501 = vsyncadd [#allocation4], %s500
      %s502 = sshll.u32 [#allocation8], 4
      %s503 = int_to_ptr.vmem [resolvable:$true] %s502
      %508 = dma.vmem_to_hbm [thread:$0]  %s503, 512, %s4, [#allocation4], 128, 128, 8
    $region33: #{tpu_custom_call.1} parent=1 // pred_fallthru
      _
    // Predicated region
    $region34: #{tpu_custom_call.1} parent=1 // pred_check
      _
    $region35: #{tpu_custom_call.1} parent=1 // pred_check_branch
      %510 = sbr.rel (0) target = $region37
    $region36: #{tpu_custom_call.1} parent=1 // pred_region
      %511 = dma.done [#allocation4], 512
    $region37: #{tpu_custom_call.1} parent=1 // pred_fallthru
      _
    %512 = vsyncpa [#allocation3], 1
    %513 = vsyncpa [#allocation6], 1
    %514 = vsyncpa [#allocation4], 1

</llo_original>
